<compile_context>
chip_gen: v5e
topology: v5e:2x2
jax: 0.10.0
libtpu: 0.0.40
codegen_flags: <defaults>
</compile_context>

<pallas_src>
import jax
import jax.numpy as jnp
from jax import lax
from jax.experimental import pallas as pl
from jax.experimental.pallas import tpu as pltpu

_LANE = 128
_TARGET_BLOCK_BYTES = 2 * 1024 * 1024  # target bytes per x (or target) block


def _make_kernel(use_weight, needs_mask, tiles_per_split, tile, hw):
    """Fused L1 kernel. Static flags: weighted path, tail-tile masking."""

    def kernel(*refs):
        if use_weight:
            x_ref, t_ref, w_ref, out_ref, acc_ref = refs
        else:
            x_ref, t_ref, out_ref, acc_ref = refs

        t_id = pl.program_id(2)  # spatial-tile axis (innermost, "arbitrary")

        @pl.when(t_id == 0)
        def _init():
            acc_ref[...] = jnp.zeros_like(acc_ref)

        x = x_ref[...].astype(jnp.float32)        # (Bblk, C, tile)
        t = t_ref[...].astype(jnp.float32)        # (Bblk, C, tile)
        d = jnp.abs(t - x)                        # pure VPU
        if use_weight:
            # (Bblk, 1, tile) broadcast across channels.
            d = d * w_ref[...].astype(jnp.float32)
        if needs_mask:
            # Mask lanes past HW in the (partial) last global tile.  Applied
            # AFTER all math so undefined OOB contents (x/t/w) are selected
            # away rather than multiplied (0 * NaN would poison the sum).
            gt = pl.program_id(0) * tiles_per_split + t_id   # global tile idx
            lane = lax.broadcasted_iota(jnp.int32, (1, 1, tile), 2)
            d = jnp.where(lane < hw - gt * tile, d, 0.0)
        acc_ref[...] += d                         # VPU add only in hot loop

        @pl.when(t_id == pl.num_programs(2) - 1)
        def _finalize():
            # One sublane (channel) reduce per batch group, then write the
            # lane-dense partial-sum slab once.
            out_ref[...] = jnp.sum(acc_ref[...], axis=1, keepdims=True)

    return kernel


def l1_loss_weighted(x, target, target_weight=None, *, max_lane_tile=None):
    """Pallas implementation of L1LossWeighted.forward (returns scalar f32)."""
    if target.shape != x.shape:
        raise ValueError(
            f"Pred and target shapes must match. Got: {x.shape}, {target.shape}")
    B, C, H, W = x.shape
    HW = H * W
    use_weight = target_weight is not None
    itemsize = jnp.dtype(x.dtype).itemsize

    # ---- tile sizing: ~2 MiB per input block, lane tile scales with 1/C ----
    hw_lanes = pl.cdiv(HW, _LANE) * _LANE
    max_tile = max(_LANE, (_TARGET_BLOCK_BYTES // (C * itemsize)) // _LANE * _LANE)
    if max_lane_tile is not None:
        max_tile = min(max_tile, max(_LANE, (max_lane_tile // _LANE) * _LANE))
    tile = min(hw_lanes, max_tile)
    n_tiles = pl.cdiv(HW, tile)

    # When the whole spatial extent fits one tile, block several batches per
    # grid step (Bblk must divide B; no batch masking needed).
    Bblk = 1
    if n_tiles == 1:
        cap = max(1, _TARGET_BLOCK_BYTES // (C * tile * itemsize))
        for d in range(min(B, cap), 0, -1):
            if B % d == 0:
                Bblk = d
                break
    Bg = B // Bblk

    # v7x megacore: if the batch-group axis can't cover both TensorCores,
    # split the spatial tiles across a leading parallel axis of extent 2.
    n_split = 2 if (Bg == 1 and n_tiles >= 2 and n_tiles % 2 == 0) else 1
    tiles_per_split = n_tiles // n_split

    needs_mask = (HW % tile) != 0

    # Lane-dense views; no data movement, no padding copies.
    xf = x.reshape(B, C, HW)
    tf = target.reshape(B, C, HW)

    def in_map(s, bg, t):
        return (bg, 0, s * tiles_per_split + t)

    in_specs = [
        pl.BlockSpec((Bblk, C, tile), in_map),
        pl.BlockSpec((Bblk, C, tile), in_map),
    ]
    call_args = [xf, tf]
    if use_weight:
        wf = target_weight.reshape(B, 1, HW)
        in_specs.append(pl.BlockSpec((Bblk, 1, tile), in_map))
        call_args.append(wf)

    partials = pl.pallas_call(
        _make_kernel(use_weight, needs_mask, tiles_per_split, tile, HW),
        out_shape=jax.ShapeDtypeStruct((n_split, B, 1, tile), jnp.float32),
        grid=(n_split, Bg, tiles_per_split),
        in_specs=in_specs,
        # Per (split, batch-group) resident partial-sum slab, written once at
        # the last spatial tile; the t axis revisits the same block.
        out_specs=pl.BlockSpec((None, Bblk, 1, tile),
                               lambda s, bg, t: (s, bg, 0, 0)),
        # Full-precision accumulator lives in VMEM scratch (hot loop stays
        # pure VPU; channel reduce deferred to the final visit).
        scratch_shapes=[pltpu.VMEM((Bblk, C, tile), jnp.float32)],
        compiler_params=pltpu.CompilerParams(
            dimension_semantics=("parallel", "parallel", "arbitrary"),
            vmem_limit_bytes=32 * 1024 * 1024),
    )(*call_args)

    # Single cross-lane reduction + normalization in plain JAX.
    return jnp.sum(partials) / (B * C * H * W)


def l1_loss_weighted_ref(x, target, target_weight=None):
    """Pure-JAX reference mirroring the PyTorch forward."""
    l1 = jnp.abs(x.astype(jnp.float32) - target.astype(jnp.float32))
    l1 = jnp.mean(l1, axis=1)                      # mean over channels -> (B, H, W)
    if target_weight is not None:
        l1 = target_weight.astype(jnp.float32) * l1
    return jnp.mean(l1)


if __name__ == "__main__":
    key = jax.random.PRNGKey(0)
    k1, k2, k3 = jax.random.split(key, 3)

    B, C, H, W = 2, 4, 16, 16
    x = jax.random.normal(k1, (B, C, H, W), dtype=jnp.float32)
    target = jax.random.normal(k2, (B, C, H, W), dtype=jnp.float32)
    target_weight = jax.random.uniform(k3, (B, H, W), dtype=jnp.float32)

    # Unweighted path (target_weight=None), single fused step (Bblk=2).
    loss = jax.block_until_ready(l1_loss_weighted(x, target))
    loss_ref = l1_loss_weighted_ref(x, target)
    assert jnp.allclose(loss, loss_ref, rtol=1e-5, atol=1e-6), (loss, loss_ref)

    # Weighted path.
    loss_w = jax.block_until_ready(l1_loss_weighted(x, target, target_weight))
    loss_w_ref = l1_loss_weighted_ref(x, target, target_weight)
    assert jnp.allclose(loss_w, loss_w_ref, rtol=1e-5, atol=1e-6), (loss_w, loss_w_ref)

    # Multi-tile + partial-last-tile (in-kernel mask) path: HW=320, tile=128.
    Hm, Wm = 16, 20
    xm = jax.random.normal(k1, (B, C, Hm, Wm), dtype=jnp.float32)
    tm = jax.random.normal(k2, (B, C, Hm, Wm), dtype=jnp.float32)
    wm = jax.random.uniform(k3, (B, Hm, Wm), dtype=jnp.float32)
    loss_m = jax.block_until_ready(
        l1_loss_weighted(xm, tm, wm, max_lane_tile=128))
    loss_m_ref = l1_loss_weighted_ref(xm, tm, wm)
    assert jnp.allclose(loss_m, loss_m_ref, rtol=1e-5, atol=1e-6), (loss_m, loss_m_ref)

    # B=1 path exercising the megacore spatial split (n_split=2).
    x1 = x[:1]
    t1 = target[:1]
    loss_s = jax.block_until_ready(l1_loss_weighted(x1, t1, max_lane_tile=128))
    loss_s_ref = l1_loss_weighted_ref(x1, t1)
    assert jnp.allclose(loss_s, loss_s_ref, rtol=1e-5, atol=1e-6), (loss_s, loss_s_ref)

    print("KERNEL_OK")
</pallas_src>

<mosaic_0001>
module attributes {stable_mosaic.version = 11 : i64} {
  func.func @kernel(%arg0: i32, %arg1: i32, %arg2: i32, %arg3: memref<2x4x256xf32, #tpu.memory_space<vmem>>, %arg4: memref<2x4x256xf32, #tpu.memory_space<vmem>>, %arg5: memref<1x2x1x256xf32, #tpu.memory_space<vmem>>, %arg6: memref<2x4x256xf32, #tpu.memory_space<vmem>>) attributes {dimension_semantics = [#tpu.dimension_semantics<parallel>, #tpu.dimension_semantics<parallel>, #tpu.dimension_semantics<arbitrary>], iteration_bounds = array<i64: 1, 1, 1>, scalar_prefetch = 0 : i64, scratch_operands = 1 : i64, tpu.core_type = #tpu.core_type<tc>, window_params = [{transform_indices = @transform_0, window_bounds = array<i64: 2, 4, 256>}, {transform_indices = @transform_1, window_bounds = array<i64: 2, 4, 256>}, {transform_indices = @transform_2, window_bounds = array<i64: 1, 2, 1, 256>}]} {
    %c0_i32 = arith.constant 0 : i32
    %0 = arith.cmpi eq, %arg2, %c0_i32 : i32
    %1 = arith.extui %0 : i1 to i32
    %c0_i32_0 = arith.constant 0 : i32
    %2 = arith.cmpi ne, %1, %c0_i32_0 : i32
    scf.if %2 {
      %cst = arith.constant 0.000000e+00 : f32
      %13 = vector.broadcast %cst : f32 to vector<2x4x256xf32>
      %c0_14 = arith.constant 0 : index
      %c0_15 = arith.constant 0 : index
      %c0_16 = arith.constant 0 : index
      %14 = vector.load %arg6[%c0_14, %c0_15, %c0_16] : memref<2x4x256xf32, #tpu.memory_space<vmem>>, vector<2x4x256xf32>
      tpu.vector_store %arg6[%c0_14, %c0_15, %c0_16], %13 {strides = array<i32>} : memref<2x4x256xf32, #tpu.memory_space<vmem>>, vector<2x4x256xf32>,
    } else {
    }
    %c0 = arith.constant 0 : index
    %c0_1 = arith.constant 0 : index
    %c0_2 = arith.constant 0 : index
    %3 = vector.load %arg3[%c0, %c0_1, %c0_2] : memref<2x4x256xf32, #tpu.memory_space<vmem>>, vector<2x4x256xf32>
    %c0_3 = arith.constant 0 : index
    %c0_4 = arith.constant 0 : index
    %c0_5 = arith.constant 0 : index
    %4 = vector.load %arg4[%c0_3, %c0_4, %c0_5] : memref<2x4x256xf32, #tpu.memory_space<vmem>>, vector<2x4x256xf32>
    %5 = arith.subf %4, %3 : vector<2x4x256xf32>
    %6 = math.absf %5 : vector<2x4x256xf32>
    %c0_6 = arith.constant 0 : index
    %c0_7 = arith.constant 0 : index
    %c0_8 = arith.constant 0 : index
    %7 = vector.load %arg6[%c0_6, %c0_7, %c0_8] : memref<2x4x256xf32, #tpu.memory_space<vmem>>, vector<2x4x256xf32>
    %8 = arith.addf %7, %6 : vector<2x4x256xf32>
    %c0_9 = arith.constant 0 : index
    %c0_10 = arith.constant 0 : index
    %c0_11 = arith.constant 0 : index
    %9 = vector.load %arg6[%c0_9, %c0_10, %c0_11] : memref<2x4x256xf32, #tpu.memory_space<vmem>>, vector<2x4x256xf32>
    tpu.vector_store %arg6[%c0_9, %c0_10, %c0_11], %8 {strides = array<i32>} : memref<2x4x256xf32, #tpu.memory_space<vmem>>, vector<2x4x256xf32>,
    %c0_i32_12 = arith.constant 0 : i32
    %10 = arith.cmpi eq, %arg2, %c0_i32_12 : i32
    %11 = arith.extui %10 : i1 to i32
    %c0_i32_13 = arith.constant 0 : i32
    %12 = arith.cmpi ne, %11, %c0_i32_13 : i32
    scf.if %12 {
      %c0_14 = arith.constant 0 : index
      %c0_15 = arith.constant 0 : index
      %c0_16 = arith.constant 0 : index
      %13 = vector.load %arg6[%c0_14, %c0_15, %c0_16] : memref<2x4x256xf32, #tpu.memory_space<vmem>>, vector<2x4x256xf32>
      %cst = arith.constant dense<0.000000e+00> : vector<2x256xf32>
      %14 = vector.multi_reduction <add>, %13, %cst [1] : vector<2x4x256xf32> to vector<2x256xf32>
      %15 = vector.shape_cast %14 : vector<2x256xf32> to vector<2x1x256xf32>
      %c0_17 = arith.constant 0 : index
      %c0_18 = arith.constant 0 : index
      %c0_19 = arith.constant 0 : index
      %c0_20 = arith.constant 0 : index
      %16 = vector.load %arg5[%c0_17, %c0_18, %c0_19, %c0_20] : memref<1x2x1x256xf32, #tpu.memory_space<vmem>>, vector<1x2x1x256xf32>
      %17 = vector.shape_cast %16 : vector<1x2x1x256xf32> to vector<2x1x256xf32>
      %18 = vector.shape_cast %15 : vector<2x1x256xf32> to vector<1x2x1x256xf32>
      tpu.vector_store %arg5[%c0_17, %c0_18, %c0_19, %c0_20], %18 {strides = array<i32>} : memref<1x2x1x256xf32, #tpu.memory_space<vmem>>, vector<1x2x1x256xf32>,
    } else {
    }
    return
  }
  func.func @transform_0(%arg0: i32, %arg1: i32, %arg2: i32) -> (i32, i32, i32) {
    %c1_i32 = arith.constant 1 : i32
    %0 = arith.muli %arg0, %c1_i32 : i32
    %1 = arith.addi %0, %arg2 : i32
    %c0_i32 = arith.constant 0 : i32
    %c0_i32_0 = arith.constant 0 : i32
    return %arg1, %c0_i32, %1 : i32, i32, i32
  }
  func.func @transform_1(%arg0: i32, %arg1: i32, %arg2: i32) -> (i32, i32, i32) {
    %c1_i32 = arith.constant 1 : i32
    %0 = arith.muli %arg0, %c1_i32 : i32
    %1 = arith.addi %0, %arg2 : i32
    %c0_i32 = arith.constant 0 : i32
    %c0_i32_0 = arith.constant 0 : i32
    return %arg1, %c0_i32, %1 : i32, i32, i32
  }
  func.func @transform_2(%arg0: i32, %arg1: i32, %arg2: i32) -> (i32, i32, i32, i32) {
    %c0_i32 = arith.constant 0 : i32
    %c0_i32_0 = arith.constant 0 : i32
    %c0_i32_1 = arith.constant 0 : i32
    return %arg0, %arg1, %c0_i32, %c0_i32_0 : i32, i32, i32, i32
  }
}

</mosaic_0001>

<llo_original>
// kernel: tpu_custom_call.1
$region0: #{tpu_custom_call.1}
  #allocation0 [shape = 'u32[]', space=smem, size = 0x4, offset = 0x4, fixed_abs, tag = 'smem constant byte address 0x4 - core index']
  #allocation1 [shape = 'u32[72,128]{1,0:T(1,128)}', space=vmem, size = 0x9000, scoped, tag = 'internal scratch']
  #allocation2 [shape = 'f32[2,4,256]{2,1,0:T(4,128)}', space=vmem, size = 0x2000, scoped, tag = 'scratch operand']
  %s0 = inlined_call_operand.hbm [shape: f32[2,4,256], index: 0, kind: input, shape index: {}]
  %s1 = inlined_call_operand.hbm [shape: f32[2,4,256], index: 1, kind: input, shape index: {}]
  %s2 = inlined_call_operand.hbm [shape: f32[1,2,1,256], index: 2, kind: output, shape index: {}]
  %s3 = sld [smem:[#allocation0]]
  $region34: #{tpu_custom_call.1} parent=0
    _
  %s5 = ssub.s32 1, %s3
  %s6 = scalar_select 0, %s5, %s3
  $region1: #{tpu_custom_call.1} parent=0
    #allocation3 [shape = 'u8[8192]{0}', space=vmem, size = 0x2000, scoped, tag = 'input window, operand 0, single buffered']
    #allocation4 [shape = 's32[1]{0}', space=sflag, size = 0x4, scoped, tag = 'scoped memory for tpu_custom_call.1']
    #allocation5 [shape = 's32[1]{0}', space=sflag, size = 0x4, scoped, tag = 'scoped memory for tpu_custom_call.1']
    #allocation6 [shape = 'u8[8192]{0}', space=vmem, size = 0x2000, scoped, tag = 'input window, operand 1, single buffered']
    #allocation7 [shape = 's32[1]{0}', space=sflag, size = 0x4, scoped, tag = 'scoped memory for tpu_custom_call.1']
    #allocation8 [shape = 'u8[2048]{0}', space=vmem, size = 0x800, scoped, tag = 'output window, operand 0, single buffered']
    %7 = vsyncpa [#allocation4], 0
    %8 = vsyncpa [#allocation7], 0
    %9 = vsyncpa [#allocation5], 0
    // Predicated region
    $region2: #{tpu_custom_call.1} parent=1 // pred_check
      _
    $region3: #{tpu_custom_call.1} parent=1 // pred_check_branch
      %11 = sbr.rel (0) target = $region5
    $region4: #{tpu_custom_call.1} parent=1 // pred_region
      %s12 = sadd.s32 0, 0
      %s13 = smul.u32 2, %s12
      %15 = vsyncadd [#allocation4], 0
      %s16 = smul.addr %s13, 4
      %s17 = scalar_lea.hbm %s0, %s16
      %s18 = sshll.u32 %s17, 4
      %s19 = int_to_ptr.hbm [resolvable:$true] %s18
      %s20 = sshll.u32 [#allocation3], 4
      %s21 = int_to_ptr.vmem [resolvable:$true] %s20
      %26 = dma.hbm_to_vmem [thread:$0]  %s19, 256, %s21, [#allocation4], 128, 128, 8
    $region5: #{tpu_custom_call.1} parent=1 // pred_fallthru
      _
    // Predicated region
    $region6: #{tpu_custom_call.1} parent=1 // pred_check
      _
    $region7: #{tpu_custom_call.1} parent=1 // pred_check_branch
      %28 = sbr.rel (0) target = $region9
    $region8: #{tpu_custom_call.1} parent=1 // pred_region
      %s29 = sadd.s32 0, 0
      %s30 = smul.u32 2, %s29
      %32 = vsyncadd [#allocation7], 0
      %s33 = smul.addr %s30, 4
      %s34 = scalar_lea.hbm %s1, %s33
      %s35 = sshll.u32 %s34, 4
      %s36 = int_to_ptr.hbm [resolvable:$true] %s35
      %s37 = sshll.u32 [#allocation6], 4
      %s38 = int_to_ptr.vmem [resolvable:$true] %s37
      %43 = dma.hbm_to_vmem [thread:$0]  %s36, 256, %s38, [#allocation7], 128, 128, 8
    $region9: #{tpu_custom_call.1} parent=1 // pred_fallthru
      _
    // Predicated region
    $region10: #{tpu_custom_call.1} parent=1 // pred_check
      _
    $region11: #{tpu_custom_call.1} parent=1 // pred_check_branch
      %45 = sbr.rel (0) target = $region13
    $region12: #{tpu_custom_call.1} parent=1 // pred_region
      %47 = dma.done [#allocation4], 256
    $region13: #{tpu_custom_call.1} parent=1 // pred_fallthru
      _
    // Predicated region
    $region14: #{tpu_custom_call.1} parent=1 // pred_check
      _
    $region15: #{tpu_custom_call.1} parent=1 // pred_check_branch
      %49 = sbr.rel (0) target = $region17
    $region16: #{tpu_custom_call.1} parent=1 // pred_region
      %51 = dma.done [#allocation7], 256
    $region17: #{tpu_custom_call.1} parent=1 // pred_fallthru
      _
    %s52 = sadd.s32 0, 0
    %s53 = smul.u32 2, %s52
    %s54 = sadd.s32 0, 0
    %s55 = smul.u32 2, %s54
    %p56 = scmp.eq.s32.totalorder 0, 0
    // Predicated region
    $region18: #{tpu_custom_call.1} parent=1 // pred_check
      %p57 = pneg %p56
    $region19: #{tpu_custom_call.1} parent=1 // pred_check_branch
      %59 = sbr.rel (%p57) target = $region21
    $region20: #{tpu_custom_call.1} parent=1 // pred_region
      %60 = vst [vmem:[#allocation2] sm:$0xff] 0.0
      %61 = vst [vmem:[#allocation2 + $0x8] sm:$0xff] 0.0
    $region21: #{tpu_custom_call.1} parent=1 // pred_fallthru
      _
    %v62 = vld [vmem:[#allocation3] sm:$0xff]
    %v63 = vld [vmem:[#allocation3 + $0x8] sm:$0xff]
    %v64 = vld [vmem:[#allocation6] sm:$0xff]
    %v65 = vld [vmem:[#allocation6 + $0x8] sm:$0xff]
    %v66 = vsub.f32 %v64, %v62
    %v67 = vsub.f32 %v65, %v63
    %v68 = vand.u32 2147483647, %v66
    %v69 = vand.u32 2147483647, %v67
    %v70 = vld [vmem:[#allocation2] sm:$0xff]
    %v71 = vld [vmem:[#allocation2 + $0x8] sm:$0xff]
    %v72 = vadd.f32 %v70, %v68
    %v73 = vadd.f32 %v71, %v69
    %74 = vst [vmem:[#allocation2] sm:$0xff] %v72
    %75 = vst [vmem:[#allocation2 + $0x8] sm:$0xff] %v73
    // Predicated region
    $region22: #{tpu_custom_call.1} parent=1 // pred_check
      %p76 = pneg %p56
    $region23: #{tpu_custom_call.1} parent=1 // pred_check_branch
      %78 = sbr.rel (%p76) target = $region25
    $region24: #{tpu_custom_call.1} parent=1 // pred_region
      %v79 = vld [vmem:[#allocation2] sm:$0xff]
      %v80 = vld [vmem:[#allocation2 + $0x8] sm:$0xff]
      %83 = vst [vmem:[#allocation1] ss:$2 sm:$0xff] %v79
      %v84 = vld.sshfl [vmem:[#allocation1] sm:$0xff pattern:$0x75316420]
      %v85 = vld.sshfl [vmem:[#allocation1 + $0x8] sm:$0xff pattern:$0x75316420]
      %s86 = scalar_lea.vmem [#allocation1], 16
      %87 = vst [vmem:[%s86] ss:$2 sm:$0xff] %v80
      %v88 = vld.sshfl [vmem:[#allocation1 + $0x10] sm:$0xff pattern:$0x75316420]
      %v89 = vld.sshfl [vmem:[#allocation1 + $0x18] sm:$0xff pattern:$0x75316420]
      %vm94 = vcmask 1043456
      %v95 = vsel %vm94, %v84, 0.0
      %v96 = vrot.slane %v95, 4
      %v97 = vadd.f32 %v95, %v96
      %v98 = vrot.slane %v97, 2
      %v99 = vadd.f32 %v97, %v98
      %v100 = vrot.slane %v99, 1
      %v101 = vadd.f32 %v99, %v100
      %v102 = vsel %vm94, %v85, 0.0
      %v103 = vrot.slane %v102, 4
      %v104 = vadd.f32 %v102, %v103
      %v105 = vrot.slane %v104, 2
      %v106 = vadd.f32 %v104, %v105
      %v107 = vrot.slane %v106, 1
      %v108 = vadd.f32 %v106, %v107
      %v109 = vsel %vm94, %v88, 0.0
      %v110 = vrot.slane %v109, 4
      %v111 = vadd.f32 %v109, %v110
      %v112 = vrot.slane %v111, 2
      %v113 = vadd.f32 %v111, %v112
      %v114 = vrot.slane %v113, 1
      %v115 = vadd.f32 %v113, %v114
      %v116 = vsel %vm94, %v89, 0.0
      %v117 = vrot.slane %v116, 4
      %v118 = vadd.f32 %v116, %v117
      %v119 = vrot.slane %v118, 2
      %v120 = vadd.f32 %v118, %v119
      %v121 = vrot.slane %v120, 1
      %v122 = vadd.f32 %v120, %v121
      %v127 = vrot.slane %v108, 7
      %v128 = vrot.slane %v122, 7
      %vm129 = vcmask 1040384
      %v130 = vsel %vm129, %v101, %v127
      %v131 = vsel %vm129, %v115, %v128
      %v134 = vlaneseq
      %vm135 = vcmp.ge.s32.totalorder %v134, 0
      %vm136 = vcmp.lt.s32.totalorder %v134, 256
      %vm137 = vmand %vm135, %vm136
      %138 = vst.msk [vmem:[#allocation8] sm:$0x3] %vm137, %v130
      %139 = vst.msk [vmem:[#allocation8 + $0x2] sm:$0x3] %vm137, %v131
    $region25: #{tpu_custom_call.1} parent=1 // pred_fallthru
      _
    // Predicated region
    $region26: #{tpu_custom_call.1} parent=1 // pred_check
      _
    $region27: #{tpu_custom_call.1} parent=1 // pred_check_branch
      %141 = sbr.rel (0) target = $region29
    $region28: #{tpu_custom_call.1} parent=1 // pred_region
      %143 = vsyncadd [#allocation5], 0
      %s144 = sshll.u32 [#allocation8], 4
      %s145 = int_to_ptr.vmem [resolvable:$true] %s144
      %s146 = sshll.u32 %s2, 4
      %s147 = int_to_ptr.hbm [resolvable:$true] %s146
      %152 = dma.vmem_to_hbm [thread:$0]  %s145, 64, %s147, [#allocation5], 32, 32, 2
    $region29: #{tpu_custom_call.1} parent=1 // pred_fallthru
      _
    // Predicated region
    $region30: #{tpu_custom_call.1} parent=1 // pred_check
      _
    $region31: #{tpu_custom_call.1} parent=1 // pred_check_branch
      %154 = sbr.rel (0) target = $region33
    $region32: #{tpu_custom_call.1} parent=1 // pred_region
      %156 = dma.done [#allocation5], 64
    $region33: #{tpu_custom_call.1} parent=1 // pred_fallthru
      _
    %157 = vsyncpa [#allocation4], 1
    %158 = vsyncpa [#allocation7], 1
    %159 = vsyncpa [#allocation5], 1

</llo_original>
